<compile_context>
chip_gen: v7x
topology: tpu7x:2x2x1
jax: 0.10.0
libtpu: 0.0.40
codegen_flags: <defaults>
</compile_context>

<pallas_src>
import jax
import jax.numpy as jnp
from jax.experimental import pallas as pl
from jax.experimental.pallas import tpu as pltpu


def _round_up(x, m):
    return ((x + m - 1) // m) * m


def mlpuser_kernel(ids_ref, len_ref, table_ref, w1_ref, b1_ref, w2_ref, b2_ref, out_ref):
    # Transposed ("batch on lanes") layout:
    #   ids_ref:   (S,  TB)  int32 token ids (0 == padding)
    #   len_ref:   (1,  TB)  float32 sentence lengths (precondition: > 0)
    #   table_ref: (Ep, Vp)  bf16 embedding table, transposed; pad rows/cols zero
    #   w1_ref:    (Fp, Ep)  bf16 Linear(E,F) weight (PyTorch (out,in) layout)
    #   b1_ref:    (Fp, 1)   f32
    #   w2_ref:    (Fp, 1)   f32 Linear(F,1) weight as a column
    #   b2_ref:    (1,  1)   f32
    #   out_ref:   (1,  TB)  f32 (lane-dense: batch on the lane axis)
    s_len, tb = ids_ref.shape
    vp = table_ref.shape[1]

    ids = ids_ref[...]                                              # (S, TB) i32
    vocab = jax.lax.broadcasted_iota(jnp.int32, (vp, tb), 0)        # vocab id on sublanes

    # Fused embedding gather + sum over the sequence, expressed as per-column token counts
    # followed by one MXU matmul:  pooled^T (Ep,TB) = table^T (Ep,Vp) @ counts^T (Vp,TB).
    # The short static loop over S keeps the live vector set to a single (Vp, TB) slab
    # (review feedback) instead of a (TB, S, Vp) 3-D intermediate.  Pad tokens (id 0) hit
    # the stored row 0 of the table, exactly matching nn.Embedding(padding_idx=0) + sum.
    counts = jnp.zeros((vp, tb), jnp.float32)
    for s in range(s_len):                                          # S is small and static
        counts = counts + (ids[s:s + 1, :] == vocab).astype(jnp.float32)

    # bf16 MXU operands (counts are exact small integers in bf16), f32 accumulation.
    pooled = jnp.dot(table_ref[...], counts.astype(jnp.bfloat16),
                     preferred_element_type=jnp.float32)            # (Ep, TB) f32

    # Length normalization (exact divide; senlen > 0 is a caller precondition).
    pooled = pooled * (1.0 / len_ref[...])                          # broadcast over sublanes

    # mlp: Linear(E, F) -> Dropout(0.5) [identity in eval] -> Tanh  (elementwise kept f32)
    h = jnp.tanh(jnp.dot(w1_ref[...], pooled.astype(jnp.bfloat16),
                         preferred_element_type=jnp.float32) + b1_ref[...])   # (Fp, TB)

    # outlayer: Linear(F, 1) -> Dropout(0.5) [identity in eval] -> Sigmoid
    # 1-wide GEMM kept off the MXU: VPU multiply + sublane (XLU) reduction.  Result is
    # already (1, TB) with batch on lanes, so the store below is an unmasked full-width vst.
    o = jnp.sum(h * w2_ref[...], axis=0, keepdims=True) + b2_ref[...]          # (1, TB)
    out_ref[...] = jax.nn.sigmoid(o)


def prepare_params(emb_table, w1, b1, w2, b2):
    """One-time padding / layout / dtype preparation (hoisted out of the forward pass).

    * feature / vocab dims zero-padded to multiples of 128 (lane-dense MXU tiles),
    * table and W1 stored transposed (features leading) and cast to bf16 for the
      bf16-native MXU (v6e / v7x; also the fast path on v5e),
    * biases / W2 kept in f32 (VPU path; v5e has no bf16 VPU).
    """
    V, E = emb_table.shape
    F = w1.shape[1]
    E_pad = _round_up(E, 128)
    F_pad = _round_up(F, 128)
    V_pad = _round_up(V, 128)

    table_t = jnp.zeros((E_pad, V_pad), jnp.bfloat16).at[:E, :V].set(
        emb_table.T.astype(jnp.bfloat16))
    w1_t = jnp.zeros((F_pad, E_pad), jnp.bfloat16).at[:F, :E].set(
        w1.T.astype(jnp.bfloat16))
    b1_col = jnp.zeros((F_pad, 1), jnp.float32).at[:F, 0].set(b1.astype(jnp.float32))
    w2_col = jnp.zeros((F_pad, 1), jnp.float32).at[:F, 0].set(
        w2.reshape(-1).astype(jnp.float32))
    b2_sc = jnp.asarray(b2, jnp.float32).reshape(1, 1)
    return {"table_t": table_t, "w1_t": w1_t, "b1_col": b1_col,
            "w2_col": w2_col, "b2": b2_sc}


def mlpuser_forward(sen, senlen, params, *, tile_b=None):
    """sen: (B, S) int token ids; senlen: (B,) lengths (> 0). Returns (B, 1) float32."""
    B, S = sen.shape
    table_t = params["table_t"]
    w1_t = params["w1_t"]
    b1_col = params["b1_col"]
    w2_col = params["w2_col"]
    b2_sc = params["b2"]
    E_pad, V_pad = table_t.shape
    F_pad = w1_t.shape[0]

    # TODO(synk): the VMEM-resident counts@table fusion only scales to small vocabularies;
    # for large V the table must be V-tiled as a reduction grid axis or kept in HBM
    # (memory_space=pl.ANY) with a manual make_async_copy row gather (v7x: 64 MiB VMEM).
    if table_t.size * table_t.dtype.itemsize > 8 * 1024 * 1024:
        raise NotImplementedError("vocab too large for the VMEM-resident table path")

    # Batch tile selection: whole working set is tiny, so small batches collapse to a
    # single grid step; large batches use 256-lane tiles (fills the MXU N dim, >=2 steps
    # so both v7x TensorCores get work via dimension_semantics=("parallel",)).
    if tile_b is None:
        tile_b = 256 if B > 256 else _round_up(B, 8)
    B_pad = _round_up(B, tile_b)
    num_steps = B_pad // tile_b

    # Batch-on-lanes inputs (pad rows: all-padding tokens, length 1 -> discarded on slice).
    ids_t = jnp.zeros((S, B_pad), jnp.int32).at[:, :B].set(sen.T.astype(jnp.int32))
    len_row = jnp.ones((1, B_pad), jnp.float32).at[0, :B].set(senlen.astype(jnp.float32))

    invariant = dict(pipeline_mode=pl.Buffered(1))   # grid-invariant -> single-buffered

    out = pl.pallas_call(
        mlpuser_kernel,
        out_shape=jax.ShapeDtypeStruct((1, B_pad), jnp.float32),
        grid=(num_steps,),
        in_specs=[
            pl.BlockSpec((S, tile_b), lambda i: (0, i)),                    # token ids
            pl.BlockSpec((1, tile_b), lambda i: (0, i)),                    # senlen
            pl.BlockSpec((E_pad, V_pad), lambda i: (0, 0), **invariant),    # table^T (bf16)
            pl.BlockSpec((F_pad, E_pad), lambda i: (0, 0), **invariant),    # W1^T   (bf16)
            pl.BlockSpec((F_pad, 1), lambda i: (0, 0), **invariant),        # b1
            pl.BlockSpec((F_pad, 1), lambda i: (0, 0), **invariant),        # W2 column
            pl.BlockSpec((1, 1), lambda i: (0, 0), **invariant),            # b2
        ],
        out_specs=pl.BlockSpec((1, tile_b), lambda i: (0, i)),              # lane-dense out
        compiler_params=pltpu.CompilerParams(
            dimension_semantics=("parallel",),        # batch tiles shard across TCs (v7x)
            vmem_limit_bytes=32 * 1024 * 1024,
        ),
    )(ids_t, len_row, table_t, w1_t, b1_col, w2_col, b2_sc)

    return out[0, :B][:, None]


def init_params(key, len_textdic, text_embedding_dim=100, final_dim=24):
    """Deterministic parameter init mirroring the PyTorch module's shapes (math layout)."""
    k_emb, k_w1, k_b1, k_w2, k_b2 = jax.random.split(key, 5)

    # nn.Embedding(len_textdic, E, padding_idx=0): N(0,1) init, row 0 zeroed.
    emb_table = jax.random.normal(k_emb, (len_textdic, text_embedding_dim), jnp.float32)
    emb_table = emb_table.at[0].set(0.0)

    # nn.Linear(E, F): U(-1/sqrt(E), 1/sqrt(E)); stored in math layout (E, F).
    lim1 = 1.0 / jnp.sqrt(jnp.float32(text_embedding_dim))
    w1 = jax.random.uniform(k_w1, (text_embedding_dim, final_dim), jnp.float32, -lim1, lim1)
    b1 = jax.random.uniform(k_b1, (final_dim,), jnp.float32, -lim1, lim1)

    # nn.Linear(F, 1): stored as (F, 1).
    lim2 = 1.0 / jnp.sqrt(jnp.float32(final_dim))
    w2 = jax.random.uniform(k_w2, (final_dim, 1), jnp.float32, -lim2, lim2)
    b2 = jax.random.uniform(k_b2, (1,), jnp.float32, -lim2, lim2)

    return emb_table, w1, b1, w2, b2


if __name__ == "__main__":
    # Small, module-consistent shapes.
    B, S = 16, 8                # batch, sequence length
    V = 64                      # len_textdic (vocab size)
    E, F = 100, 24              # text_embedding_dim, final_dim

    key = jax.random.PRNGKey(0)
    k_params, k_sen = jax.random.split(key)

    emb_table, w1, b1, w2, b2 = init_params(k_params, V, E, F)
    params = prepare_params(emb_table, w1, b1, w2, b2)   # one-time pad/transpose/cast

    # Token ids; some are 0 (padding). senlen = number of non-pad tokens (guarded > 0).
    sen = jax.random.randint(k_sen, (B, S), 0, V, dtype=jnp.int32)
    senlen = jnp.maximum(jnp.sum(sen != 0, axis=1), 1).astype(jnp.float32)

    out = mlpuser_forward(sen, senlen, params)
    out = jax.block_until_ready(out)

    # Pure-f32 JAX reference (eval-mode dropout == identity).  Kernel uses bf16 MXU
    # operands for the table / W1, hence the ~1e-2 tolerance against the f32 reference.
    pooled_ref = jnp.sum(jnp.take(emb_table, sen, axis=0), axis=1) / senlen[:, None]
    h_ref = jnp.tanh(pooled_ref @ w1 + b1)
    ref = jax.nn.sigmoid(h_ref @ w2 + b2)
    assert out.shape == (B, 1)
    assert jnp.allclose(out, ref, atol=1e-2, rtol=1e-2)

    # TODO(synk): Dropout(p=0.5) is implemented as identity (inference semantics);
    # training-mode stochastic dropout would need pltpu.prng_seed / prng_random_bits.
    print("KERNEL_OK")
</pallas_src>

<mosaic_0001>
module attributes {stable_mosaic.version = 11 : i64} {
  func.func @mlpuser_kernel(%arg0: i32, %arg1: memref<8x16xi32, #tpu.memory_space<vmem>>, %arg2: memref<1x16xf32, #tpu.memory_space<vmem>>, %arg3: memref<128x128xbf16, #tpu.memory_space<vmem>>, %arg4: memref<128x128xbf16, #tpu.memory_space<vmem>>, %arg5: memref<128x1xf32, #tpu.memory_space<vmem>>, %arg6: memref<128x1xf32, #tpu.memory_space<vmem>>, %arg7: memref<1x1xf32, #tpu.memory_space<vmem>>, %arg8: memref<1x16xf32, #tpu.memory_space<vmem>>) attributes {dimension_semantics = [#tpu.dimension_semantics<parallel>], iteration_bounds = array<i64: 1>, scalar_prefetch = 0 : i64, scratch_operands = 0 : i64, tpu.core_type = #tpu.core_type<tc>, window_params = [{transform_indices = @transform_0, window_bounds = array<i64: 8, 16>}, {transform_indices = @transform_1, window_bounds = array<i64: 1, 16>}, {pipeline_mode = #tpu.pipeline_mode<synchronous>, transform_indices = @transform_2, window_bounds = array<i64: 128, 128>}, {pipeline_mode = #tpu.pipeline_mode<synchronous>, transform_indices = @transform_3, window_bounds = array<i64: 128, 128>}, {pipeline_mode = #tpu.pipeline_mode<synchronous>, transform_indices = @transform_4, window_bounds = array<i64: 128, 1>}, {pipeline_mode = #tpu.pipeline_mode<synchronous>, transform_indices = @transform_5, window_bounds = array<i64: 128, 1>}, {pipeline_mode = #tpu.pipeline_mode<synchronous>, transform_indices = @transform_6, window_bounds = array<i64: 1, 1>}, {transform_indices = @transform_7, window_bounds = array<i64: 1, 16>}]} {
    %c0 = arith.constant 0 : index
    %c0_0 = arith.constant 0 : index
    %0 = vector.load %arg1[%c0, %c0_0] : memref<8x16xi32, #tpu.memory_space<vmem>>, vector<8x16xi32>
    %1 = tpu.iota {dimensions = array<i32: 0>} : vector<128x16xi32>
    %cst = arith.constant 0.000000e+00 : f32
    %2 = vector.broadcast %cst : f32 to vector<128x16xf32>
    %3 = vector.extract_strided_slice %0 {offsets = [0, 0], sizes = [1, 16], strides = [1, 1]} : vector<8x16xi32> to vector<1x16xi32>
    %4 = vector.broadcast %3 : vector<1x16xi32> to vector<128x16xi32>
    %5 = arith.cmpi eq, %4, %1 : vector<128x16xi32>
    %6 = arith.extui %5 : vector<128x16xi1> to vector<128x16xi32>
    %7 = arith.sitofp %6 : vector<128x16xi32> to vector<128x16xf32>
    %8 = arith.addf %2, %7 : vector<128x16xf32>
    %9 = vector.extract_strided_slice %0 {offsets = [1, 0], sizes = [1, 16], strides = [1, 1]} : vector<8x16xi32> to vector<1x16xi32>
    %10 = vector.broadcast %9 : vector<1x16xi32> to vector<128x16xi32>
    %11 = arith.cmpi eq, %10, %1 : vector<128x16xi32>
    %12 = arith.extui %11 : vector<128x16xi1> to vector<128x16xi32>
    %13 = arith.sitofp %12 : vector<128x16xi32> to vector<128x16xf32>
    %14 = arith.addf %8, %13 : vector<128x16xf32>
    %15 = vector.extract_strided_slice %0 {offsets = [2, 0], sizes = [1, 16], strides = [1, 1]} : vector<8x16xi32> to vector<1x16xi32>
    %16 = vector.broadcast %15 : vector<1x16xi32> to vector<128x16xi32>
    %17 = arith.cmpi eq, %16, %1 : vector<128x16xi32>
    %18 = arith.extui %17 : vector<128x16xi1> to vector<128x16xi32>
    %19 = arith.sitofp %18 : vector<128x16xi32> to vector<128x16xf32>
    %20 = arith.addf %14, %19 : vector<128x16xf32>
    %21 = vector.extract_strided_slice %0 {offsets = [3, 0], sizes = [1, 16], strides = [1, 1]} : vector<8x16xi32> to vector<1x16xi32>
    %22 = vector.broadcast %21 : vector<1x16xi32> to vector<128x16xi32>
    %23 = arith.cmpi eq, %22, %1 : vector<128x16xi32>
    %24 = arith.extui %23 : vector<128x16xi1> to vector<128x16xi32>
    %25 = arith.sitofp %24 : vector<128x16xi32> to vector<128x16xf32>
    %26 = arith.addf %20, %25 : vector<128x16xf32>
    %27 = vector.extract_strided_slice %0 {offsets = [4, 0], sizes = [1, 16], strides = [1, 1]} : vector<8x16xi32> to vector<1x16xi32>
    %28 = vector.broadcast %27 : vector<1x16xi32> to vector<128x16xi32>
    %29 = arith.cmpi eq, %28, %1 : vector<128x16xi32>
    %30 = arith.extui %29 : vector<128x16xi1> to vector<128x16xi32>
    %31 = arith.sitofp %30 : vector<128x16xi32> to vector<128x16xf32>
    %32 = arith.addf %26, %31 : vector<128x16xf32>
    %33 = vector.extract_strided_slice %0 {offsets = [5, 0], sizes = [1, 16], strides = [1, 1]} : vector<8x16xi32> to vector<1x16xi32>
    %34 = vector.broadcast %33 : vector<1x16xi32> to vector<128x16xi32>
    %35 = arith.cmpi eq, %34, %1 : vector<128x16xi32>
    %36 = arith.extui %35 : vector<128x16xi1> to vector<128x16xi32>
    %37 = arith.sitofp %36 : vector<128x16xi32> to vector<128x16xf32>
    %38 = arith.addf %32, %37 : vector<128x16xf32>
    %39 = vector.extract_strided_slice %0 {offsets = [6, 0], sizes = [1, 16], strides = [1, 1]} : vector<8x16xi32> to vector<1x16xi32>
    %40 = vector.broadcast %39 : vector<1x16xi32> to vector<128x16xi32>
    %41 = arith.cmpi eq, %40, %1 : vector<128x16xi32>
    %42 = arith.extui %41 : vector<128x16xi1> to vector<128x16xi32>
    %43 = arith.sitofp %42 : vector<128x16xi32> to vector<128x16xf32>
    %44 = arith.addf %38, %43 : vector<128x16xf32>
    %45 = vector.extract_strided_slice %0 {offsets = [7, 0], sizes = [1, 16], strides = [1, 1]} : vector<8x16xi32> to vector<1x16xi32>
    %46 = vector.broadcast %45 : vector<1x16xi32> to vector<128x16xi32>
    %47 = arith.cmpi eq, %46, %1 : vector<128x16xi32>
    %48 = arith.extui %47 : vector<128x16xi1> to vector<128x16xi32>
    %49 = arith.sitofp %48 : vector<128x16xi32> to vector<128x16xf32>
    %50 = arith.addf %44, %49 : vector<128x16xf32>
    %c0_1 = arith.constant 0 : index
    %c0_2 = arith.constant 0 : index
    %51 = vector.load %arg3[%c0_1, %c0_2] : memref<128x128xbf16, #tpu.memory_space<vmem>>, vector<128x128xbf16>
    %52 = arith.truncf %50 : vector<128x16xf32> to vector<128x16xbf16>
    %cst_3 = arith.constant dense<0.000000e+00> : vector<128x16xf32>
    %53 = tpu.matmul %51, %52, %cst_3 {dimension_numbers = #tpu.dot_dimension_numbers<[1], [0], [0], [1], [0, 0, 1, 1], [], []>} : vector<128x128xbf16>, vector<128x16xbf16>, vector<128x16xf32> -> vector<128x16xf32>
    %c0_4 = arith.constant 0 : index
    %c0_5 = arith.constant 0 : index
    %54 = vector.load %arg2[%c0_4, %c0_5] : memref<1x16xf32, #tpu.memory_space<vmem>>, vector<1x16xf32>
    %cst_6 = arith.constant 1.000000e+00 : f32
    %55 = vector.broadcast %cst_6 : f32 to vector<1x16xf32>
    %56 = arith.divf %55, %54 : vector<1x16xf32>
    %57 = vector.broadcast %56 : vector<1x16xf32> to vector<128x16xf32>
    %58 = arith.mulf %53, %57 : vector<128x16xf32>
    %c0_7 = arith.constant 0 : index
    %c0_8 = arith.constant 0 : index
    %59 = vector.load %arg4[%c0_7, %c0_8] : memref<128x128xbf16, #tpu.memory_space<vmem>>, vector<128x128xbf16>
    %60 = arith.truncf %58 : vector<128x16xf32> to vector<128x16xbf16>
    %cst_9 = arith.constant dense<0.000000e+00> : vector<128x16xf32>
    %61 = tpu.matmul %59, %60, %cst_9 {dimension_numbers = #tpu.dot_dimension_numbers<[1], [0], [0], [1], [0, 0, 1, 1], [], []>} : vector<128x128xbf16>, vector<128x16xbf16>, vector<128x16xf32> -> vector<128x16xf32>
    %c0_10 = arith.constant 0 : index
    %c0_11 = arith.constant 0 : index
    %62 = vector.load %arg5[%c0_10, %c0_11] : memref<128x1xf32, #tpu.memory_space<vmem>>, vector<128x1xf32>
    %63 = vector.broadcast %62 : vector<128x1xf32> to vector<128x16xf32>
    %64 = arith.addf %61, %63 : vector<128x16xf32>
    %65 = math.tanh %64 : vector<128x16xf32>
    %c0_12 = arith.constant 0 : index
    %c0_13 = arith.constant 0 : index
    %66 = vector.load %arg6[%c0_12, %c0_13] : memref<128x1xf32, #tpu.memory_space<vmem>>, vector<128x1xf32>
    %67 = vector.broadcast %66 : vector<128x1xf32> to vector<128x16xf32>
    %68 = arith.mulf %65, %67 : vector<128x16xf32>
    %cst_14 = arith.constant dense<0.000000e+00> : vector<16xf32>
    %69 = vector.multi_reduction <add>, %68, %cst_14 [0] : vector<128x16xf32> to vector<16xf32>
    %70 = vector.shape_cast %69 : vector<16xf32> to vector<1x16xf32>
    %c0_15 = arith.constant 0 : index
    %c0_16 = arith.constant 0 : index
    %71 = vector.load %arg7[%c0_15, %c0_16] : memref<1x1xf32, #tpu.memory_space<vmem>>, vector<1x1xf32>
    %72 = vector.broadcast %71 : vector<1x1xf32> to vector<1x16xf32>
    %73 = arith.addf %70, %72 : vector<1x16xf32>
    %74 = arith.negf %73 : vector<1x16xf32>
    %75 = math.exp %74 : vector<1x16xf32>
    %cst_17 = arith.constant 1.000000e+00 : f32
    %76 = vector.broadcast %cst_17 : f32 to vector<1x16xf32>
    %77 = arith.addf %76, %75 : vector<1x16xf32>
    %78 = arith.divf %76, %77 : vector<1x16xf32>
    %c0_18 = arith.constant 0 : index
    %c0_19 = arith.constant 0 : index
    %79 = vector.load %arg8[%c0_18, %c0_19] : memref<1x16xf32, #tpu.memory_space<vmem>>, vector<1x16xf32>
    tpu.vector_store %arg8[%c0_18, %c0_19], %78 {strides = array<i32>} : memref<1x16xf32, #tpu.memory_space<vmem>>, vector<1x16xf32>,
    return
  }
  func.func @transform_0(%arg0: i32) -> (i32, i32) {
    %c0_i32 = arith.constant 0 : i32
    %c0_i32_0 = arith.constant 0 : i32
    return %c0_i32, %arg0 : i32, i32
  }
  func.func @transform_1(%arg0: i32) -> (i32, i32) {
    %c0_i32 = arith.constant 0 : i32
    %c0_i32_0 = arith.constant 0 : i32
    return %c0_i32, %arg0 : i32, i32
  }
  func.func @transform_2(%arg0: i32) -> (i32, i32) {
    %c0_i32 = arith.constant 0 : i32
    %c0_i32_0 = arith.constant 0 : i32
    %c0_i32_1 = arith.constant 0 : i32
    return %c0_i32, %c0_i32_0 : i32, i32
  }
  func.func @transform_3(%arg0: i32) -> (i32, i32) {
    %c0_i32 = arith.constant 0 : i32
    %c0_i32_0 = arith.constant 0 : i32
    %c0_i32_1 = arith.constant 0 : i32
    return %c0_i32, %c0_i32_0 : i32, i32
  }
  func.func @transform_4(%arg0: i32) -> (i32, i32) {
    %c0_i32 = arith.constant 0 : i32
    %c0_i32_0 = arith.constant 0 : i32
    %c0_i32_1 = arith.constant 0 : i32
    return %c0_i32, %c0_i32_0 : i32, i32
  }
  func.func @transform_5(%arg0: i32) -> (i32, i32) {
    %c0_i32 = arith.constant 0 : i32
    %c0_i32_0 = arith.constant 0 : i32
    %c0_i32_1 = arith.constant 0 : i32
    return %c0_i32, %c0_i32_0 : i32, i32
  }
  func.func @transform_6(%arg0: i32) -> (i32, i32) {
    %c0_i32 = arith.constant 0 : i32
    %c0_i32_0 = arith.constant 0 : i32
    %c0_i32_1 = arith.constant 0 : i32
    return %c0_i32, %c0_i32_0 : i32, i32
  }
  func.func @transform_7(%arg0: i32) -> (i32, i32) {
    %c0_i32 = arith.constant 0 : i32
    %c0_i32_0 = arith.constant 0 : i32
    return %c0_i32, %arg0 : i32, i32
  }
}

</mosaic_0001>

<llo_original>
// kernel: tpu_custom_call.1
$region0: #{tpu_custom_call.1}
  #allocation0 [shape = 'u32[]', space=smem, size = 0x4, offset = 0x4, fixed_abs, tag = 'smem constant byte address 0x4 - core index']
  #allocation1 [shape = 'u32[144,128]{1,0:T(1,128)}', space=vmem, size = 0x12000, scoped, tag = 'internal scratch']
  #allocation2 [shape = 'f32[1,1]{1,0:T(1,128)S(1)}', space=vmem, size = 0x200, scoped, tag = 'scoped memory for tpu_custom_call.1']
  %s0 = inlined_call_operand.vmem [shape: s32[8,16], index: 0, kind: input, shape index: {}]
  %s1 = inlined_call_operand.vmem [shape: f32[1,16], index: 1, kind: input, shape index: {}]
  %s2 = inlined_call_operand.vmem [shape: bf16[128,128], index: 2, kind: input, shape index: {}]
  %s3 = inlined_call_operand.vmem [shape: bf16[128,128], index: 3, kind: input, shape index: {}]
  %s4 = inlined_call_operand.vmem [shape: f32[128,1], index: 4, kind: input, shape index: {}]
  %s5 = inlined_call_operand.vmem [shape: f32[128,1], index: 5, kind: input, shape index: {}]
  %s6 = inlined_call_operand.<no memory space> [shape: f32[1,1], index: 6, kind: input, shape index: {}]
  %s7 = inlined_call_operand.hbm [shape: f32[1,16], index: 7, kind: output, shape index: {}]
  %s8 = sld [smem:[#allocation0]]
  $region38: #{tpu_custom_call.1} parent=0
    _
  %s10 = ssub.s32 1, %s8
  %s11 = scalar_select 0, %s10, %s8
  %v12 = vstv %s6
  %13 = vst [vmem:[#allocation2] sm:$0x1] %v12
  $region1: #{tpu_custom_call.1} parent=0
    #allocation3 [shape = 'u8[512]{0}', space=vmem, size = 0x400, scoped, tag = 'output window, operand 0, single buffered']
    #allocation4 [shape = 's32[1]{0}', space=sflag, size = 0x4, scoped, tag = 'scoped memory for tpu_custom_call.1']
    %14 = vsyncpa [#allocation4], 0
    // Predicated region
    $region2: #{tpu_custom_call.1} parent=1 // pred_check
      _
    $region3: #{tpu_custom_call.1} parent=1 // pred_check_branch
      %16 = sbr.rel (0) target = $region5
    $region4: #{tpu_custom_call.1} parent=1 // pred_region
      _
    $region5: #{tpu_custom_call.1} parent=1 // pred_fallthru
      _
    // Predicated region
    $region6: #{tpu_custom_call.1} parent=1 // pred_check
      _
    $region7: #{tpu_custom_call.1} parent=1 // pred_check_branch
      %18 = sbr.rel (0) target = $region9
    $region8: #{tpu_custom_call.1} parent=1 // pred_region
      _
    $region9: #{tpu_custom_call.1} parent=1 // pred_fallthru
      _
    // Predicated region
    $region10: #{tpu_custom_call.1} parent=1 // pred_check
      _
    $region11: #{tpu_custom_call.1} parent=1 // pred_check_branch
      %20 = sbr.rel (0) target = $region13
    $region12: #{tpu_custom_call.1} parent=1 // pred_region
      _
    $region13: #{tpu_custom_call.1} parent=1 // pred_fallthru
      _
    // Predicated region
    $region14: #{tpu_custom_call.1} parent=1 // pred_check
      _
    $region15: #{tpu_custom_call.1} parent=1 // pred_check_branch
      %22 = sbr.rel (0) target = $region17
    $region16: #{tpu_custom_call.1} parent=1 // pred_region
      _
    $region17: #{tpu_custom_call.1} parent=1 // pred_fallthru
      _
    // Predicated region
    $region18: #{tpu_custom_call.1} parent=1 // pred_check
      _
    $region19: #{tpu_custom_call.1} parent=1 // pred_check_branch
      %24 = sbr.rel (0) target = $region21
    $region20: #{tpu_custom_call.1} parent=1 // pred_region
      _
    $region21: #{tpu_custom_call.1} parent=1 // pred_fallthru
      _
    // Predicated region
    $region22: #{tpu_custom_call.1} parent=1 // pred_check
      _
    $region23: #{tpu_custom_call.1} parent=1 // pred_check_branch
      %26 = sbr.rel (0) target = $region25
    $region24: #{tpu_custom_call.1} parent=1 // pred_region
      _
    $region25: #{tpu_custom_call.1} parent=1 // pred_fallthru
      _
    // Predicated region
    $region26: #{tpu_custom_call.1} parent=1 // pred_check
      _
    $region27: #{tpu_custom_call.1} parent=1 // pred_check_branch
      %28 = sbr.rel (0) target = $region29
    $region28: #{tpu_custom_call.1} parent=1 // pred_region
      _
    $region29: #{tpu_custom_call.1} parent=1 // pred_fallthru
      _
    %v30 = vld [vmem:[%s0] sm:$0xff]
    %v31 = vlaneseq
    %v32 = vshrl.u32 %v31, 7
    %v33 = vadd.s32 %v32, 8
    %v34 = vadd.s32 %v32, 16
    %v35 = vadd.s32 %v32, 24
    %v36 = vadd.s32 %v32, 32
    %v37 = vadd.s32 %v32, 40
    %v38 = vadd.s32 %v32, 48
    %v39 = vadd.s32 %v32, 56
    %v40 = vadd.s32 %v32, 64
    %v41 = vadd.s32 %v32, 72
    %v42 = vadd.s32 %v32, 80
    %v43 = vadd.s32 %v32, 88
    %v44 = vadd.s32 %v32, 96
    %v45 = vadd.s32 %v32, 104
    %v46 = vadd.s32 %v32, 112
    %v47 = vadd.s32 %v32, 120
    %v48 = vlaneseq
    %v49 = vshrl.u32 %v48, 7
    %v50 = vsub.s32 0, %v49
    %v51 = vrot.slane %v30, %v50
    %vm52 = vcmp.eq.s32.totalorder %v51, %v32
    %vm53 = vcmp.eq.s32.totalorder %v51, %v33
    %vm54 = vcmp.eq.s32.totalorder %v51, %v34
    %vm55 = vcmp.eq.s32.totalorder %v51, %v35
    %vm56 = vcmp.eq.s32.totalorder %v51, %v36
    %vm57 = vcmp.eq.s32.totalorder %v51, %v37
    %vm58 = vcmp.eq.s32.totalorder %v51, %v38
    %vm59 = vcmp.eq.s32.totalorder %v51, %v39
    %vm60 = vcmp.eq.s32.totalorder %v51, %v40
    %vm61 = vcmp.eq.s32.totalorder %v51, %v41
    %vm62 = vcmp.eq.s32.totalorder %v51, %v42
    %vm63 = vcmp.eq.s32.totalorder %v51, %v43
    %vm64 = vcmp.eq.s32.totalorder %v51, %v44
    %vm65 = vcmp.eq.s32.totalorder %v51, %v45
    %vm66 = vcmp.eq.s32.totalorder %v51, %v46
    %vm67 = vcmp.eq.s32.totalorder %v51, %v47
    %v68 = vsel %vm52, 1, 0
    %v69 = vsel %vm53, 1, 0
    %v70 = vsel %vm54, 1, 0
    %v71 = vsel %vm55, 1, 0
    %v72 = vsel %vm56, 1, 0
    %v73 = vsel %vm57, 1, 0
    %v74 = vsel %vm58, 1, 0
    %v75 = vsel %vm59, 1, 0
    %v76 = vsel %vm60, 1, 0
    %v77 = vsel %vm61, 1, 0
    %v78 = vsel %vm62, 1, 0
    %v79 = vsel %vm63, 1, 0
    %v80 = vsel %vm64, 1, 0
    %v81 = vsel %vm65, 1, 0
    %v82 = vsel %vm66, 1, 0
    %v83 = vsel %vm67, 1, 0
    %v84 = vcvt.s32.f32 %v68
    %v85 = vcvt.s32.f32 %v69
    %v86 = vcvt.s32.f32 %v70
    %v87 = vcvt.s32.f32 %v71
    %v88 = vcvt.s32.f32 %v72
    %v89 = vcvt.s32.f32 %v73
    %v90 = vcvt.s32.f32 %v74
    %v91 = vcvt.s32.f32 %v75
    %v92 = vcvt.s32.f32 %v76
    %v93 = vcvt.s32.f32 %v77
    %v94 = vcvt.s32.f32 %v78
    %v95 = vcvt.s32.f32 %v79
    %v96 = vcvt.s32.f32 %v80
    %v97 = vcvt.s32.f32 %v81
    %v98 = vcvt.s32.f32 %v82
    %v99 = vcvt.s32.f32 %v83
    %v100 = vadd.f32 %v84, 0.0
    %v101 = vadd.f32 %v85, 0.0
    %v102 = vadd.f32 %v86, 0.0
    %v103 = vadd.f32 %v87, 0.0
    %v104 = vadd.f32 %v88, 0.0
    %v105 = vadd.f32 %v89, 0.0
    %v106 = vadd.f32 %v90, 0.0
    %v107 = vadd.f32 %v91, 0.0
    %v108 = vadd.f32 %v92, 0.0
    %v109 = vadd.f32 %v93, 0.0
    %v110 = vadd.f32 %v94, 0.0
    %v111 = vadd.f32 %v95, 0.0
    %v112 = vadd.f32 %v96, 0.0
    %v113 = vadd.f32 %v97, 0.0
    %v114 = vadd.f32 %v98, 0.0
    %v115 = vadd.f32 %v99, 0.0
    %v116 = vlaneseq
    %v117 = vshrl.u32 %v116, 7
    %v118 = vsub.s32 1, %v117
    %v119 = vrot.slane %v30, %v118
    %vm120 = vcmp.eq.s32.totalorder %v119, %v32
    %vm121 = vcmp.eq.s32.totalorder %v119, %v33
    %vm122 = vcmp.eq.s32.totalorder %v119, %v34
    %vm123 = vcmp.eq.s32.totalorder %v119, %v35
    %vm124 = vcmp.eq.s32.totalorder %v119, %v36
    %vm125 = vcmp.eq.s32.totalorder %v119, %v37
    %vm126 = vcmp.eq.s32.totalorder %v119, %v38
    %vm127 = vcmp.eq.s32.totalorder %v119, %v39
    %vm128 = vcmp.eq.s32.totalorder %v119, %v40
    %vm129 = vcmp.eq.s32.totalorder %v119, %v41
    %vm130 = vcmp.eq.s32.totalorder %v119, %v42
    %vm131 = vcmp.eq.s32.totalorder %v119, %v43
    %vm132 = vcmp.eq.s32.totalorder %v119, %v44
    %vm133 = vcmp.eq.s32.totalorder %v119, %v45
    %vm134 = vcmp.eq.s32.totalorder %v119, %v46
    %vm135 = vcmp.eq.s32.totalorder %v119, %v47
    %v136 = vsel %vm120, 1, 0
    %v137 = vsel %vm121, 1, 0
    %v138 = vsel %vm122, 1, 0
    %v139 = vsel %vm123, 1, 0
    %v140 = vsel %vm124, 1, 0
    %v141 = vsel %vm125, 1, 0
    %v142 = vsel %vm126, 1, 0
    %v143 = vsel %vm127, 1, 0
    %v144 = vsel %vm128, 1, 0
    %v145 = vsel %vm129, 1, 0
    %v146 = vsel %vm130, 1, 0
    %v147 = vsel %vm131, 1, 0
    %v148 = vsel %vm132, 1, 0
    %v149 = vsel %vm133, 1, 0
    %v150 = vsel %vm134, 1, 0
    %v151 = vsel %vm135, 1, 0
    %v152 = vcvt.s32.f32 %v136
    %v153 = vcvt.s32.f32 %v137
    %v154 = vcvt.s32.f32 %v138
    %v155 = vcvt.s32.f32 %v139
    %v156 = vcvt.s32.f32 %v140
    %v157 = vcvt.s32.f32 %v141
    %v158 = vcvt.s32.f32 %v142
    %v159 = vcvt.s32.f32 %v143
    %v160 = vcvt.s32.f32 %v144
    %v161 = vcvt.s32.f32 %v145
    %v162 = vcvt.s32.f32 %v146
    %v163 = vcvt.s32.f32 %v147
    %v164 = vcvt.s32.f32 %v148
    %v165 = vcvt.s32.f32 %v149
    %v166 = vcvt.s32.f32 %v150
    %v167 = vcvt.s32.f32 %v151
    %v168 = vadd.f32 %v100, %v152
    %v169 = vadd.f32 %v101, %v153
    %v170 = vadd.f32 %v102, %v154
    %v171 = vadd.f32 %v103, %v155
    %v172 = vadd.f32 %v104, %v156
    %v173 = vadd.f32 %v105, %v157
    %v174 = vadd.f32 %v106, %v158
    %v175 = vadd.f32 %v107, %v159
    %v176 = vadd.f32 %v108, %v160
    %v177 = vadd.f32 %v109, %v161
    %v178 = vadd.f32 %v110, %v162
    %v179 = vadd.f32 %v111, %v163
    %v180 = vadd.f32 %v112, %v164
    %v181 = vadd.f32 %v113, %v165
    %v182 = vadd.f32 %v114, %v166
    %v183 = vadd.f32 %v115, %v167
    %v184 = vlaneseq
    %v185 = vshrl.u32 %v184, 7
    %v186 = vsub.s32 2, %v185
    %v187 = vrot.slane %v30, %v186
    %vm188 = vcmp.eq.s32.totalorder %v187, %v32
    %vm189 = vcmp.eq.s32.totalorder %v187, %v33
    %vm190 = vcmp.eq.s32.totalorder %v187, %v34
    %vm191 = vcmp.eq.s32.totalorder %v187, %v35
    %vm192 = vcmp.eq.s32.totalorder %v187, %v36
    %vm193 = vcmp.eq.s32.totalorder %v187, %v37
    %vm194 = vcmp.eq.s32.totalorder %v187, %v38
    %vm195 = vcmp.eq.s32.totalorder %v187, %v39
    %vm196 = vcmp.eq.s32.totalorder %v187, %v40
    %vm197 = vcmp.eq.s32.totalorder %v187, %v41
    %vm198 = vcmp.eq.s32.totalorder %v187, %v42
    %vm199 = vcmp.eq.s32.totalorder %v187, %v43
    %vm200 = vcmp.eq.s32.totalorder %v187, %v44
    %vm201 = vcmp.eq.s32.totalorder %v187, %v45
    %vm202 = vcmp.eq.s32.totalorder %v187, %v46
    %vm203 = vcmp.eq.s32.totalorder %v187, %v47
    %v204 = vsel %vm188, 1, 0
    %v205 = vsel %vm189, 1, 0
    %v206 = vsel %vm190, 1, 0
    %v207 = vsel %vm191, 1, 0
    %v208 = vsel %vm192, 1, 0
    %v209 = vsel %vm193, 1, 0
    %v210 = vsel %vm194, 1, 0
    %v211 = vsel %vm195, 1, 0
    %v212 = vsel %vm196, 1, 0
    %v213 = vsel %vm197, 1, 0
    %v214 = vsel %vm198, 1, 0
    %v215 = vsel %vm199, 1, 0
    %v216 = vsel %vm200, 1, 0
    %v217 = vsel %vm201, 1, 0
    %v218 = vsel %vm202, 1, 0
    %v219 = vsel %vm203, 1, 0
    %v220 = vcvt.s32.f32 %v204
    %v221 = vcvt.s32.f32 %v205
    %v222 = vcvt.s32.f32 %v206
    %v223 = vcvt.s32.f32 %v207
    %v224 = vcvt.s32.f32 %v208
    %v225 = vcvt.s32.f32 %v209
    %v226 = vcvt.s32.f32 %v210
    %v227 = vcvt.s32.f32 %v211
    %v228 = vcvt.s32.f32 %v212
    %v229 = vcvt.s32.f32 %v213
    %v230 = vcvt.s32.f32 %v214
    %v231 = vcvt.s32.f32 %v215
    %v232 = vcvt.s32.f32 %v216
    %v233 = vcvt.s32.f32 %v217
    %v234 = vcvt.s32.f32 %v218
    %v235 = vcvt.s32.f32 %v219
    %v236 = vadd.f32 %v168, %v220
    %v237 = vadd.f32 %v169, %v221
    %v238 = vadd.f32 %v170, %v222
    %v239 = vadd.f32 %v171, %v223
    %v240 = vadd.f32 %v172, %v224
    %v241 = vadd.f32 %v173, %v225
    %v242 = vadd.f32 %v174, %v226
    %v243 = vadd.f32 %v175, %v227
    %v244 = vadd.f32 %v176, %v228
    %v245 = vadd.f32 %v177, %v229
    %v246 = vadd.f32 %v178, %v230
    %v247 = vadd.f32 %v179, %v231
    %v248 = vadd.f32 %v180, %v232
    %v249 = vadd.f32 %v181, %v233
    %v250 = vadd.f32 %v182, %v234
    %v251 = vadd.f32 %v183, %v235
    %v252 = vlaneseq
    %v253 = vshrl.u32 %v252, 7
    %v254 = vsub.s32 3, %v253
    %v255 = vrot.slane %v30, %v254
    %vm256 = vcmp.eq.s32.totalorder %v255, %v32
    %vm257 = vcmp.eq.s32.totalorder %v255, %v33
    %vm258 = vcmp.eq.s32.totalorder %v255, %v34
    %vm259 = vcmp.eq.s32.totalorder %v255, %v35
    %vm260 = vcmp.eq.s32.totalorder %v255, %v36
    %vm261 = vcmp.eq.s32.totalorder %v255, %v37
    %vm262 = vcmp.eq.s32.totalorder %v255, %v38
    %vm263 = vcmp.eq.s32.totalorder %v255, %v39
    %vm264 = vcmp.eq.s32.totalorder %v255, %v40
    %vm265 = vcmp.eq.s32.totalorder %v255, %v41
    %vm266 = vcmp.eq.s32.totalorder %v255, %v42
    %vm267 = vcmp.eq.s32.totalorder %v255, %v43
    %vm268 = vcmp.eq.s32.totalorder %v255, %v44
    %vm269 = vcmp.eq.s32.totalorder %v255, %v45
    %vm270 = vcmp.eq.s32.totalorder %v255, %v46
    %vm271 = vcmp.eq.s32.totalorder %v255, %v47
    %v272 = vsel %vm256, 1, 0
    %v273 = vsel %vm257, 1, 0
    %v274 = vsel %vm258, 1, 0
    %v275 = vsel %vm259, 1, 0
    %v276 = vsel %vm260, 1, 0
    %v277 = vsel %vm261, 1, 0
    %v278 = vsel %vm262, 1, 0
    %v279 = vsel %vm263, 1, 0
    %v280 = vsel %vm264, 1, 0
    %v281 = vsel %vm265, 1, 0
    %v282 = vsel %vm266, 1, 0
    %v283 = vsel %vm267, 1, 0
    %v284 = vsel %vm268, 1, 0
    %v285 = vsel %vm269, 1, 0
    %v286 = vsel %vm270, 1, 0
    %v287 = vsel %vm271, 1, 0
    %v288 = vcvt.s32.f32 %v272
    %v289 = vcvt.s32.f32 %v273
    %v290 = vcvt.s32.f32 %v274
    %v291 = vcvt.s32.f32 %v275
    %v292 = vcvt.s32.f32 %v276
    %v293 = vcvt.s32.f32 %v277
    %v294 = vcvt.s32.f32 %v278
    %v295 = vcvt.s32.f32 %v279
    %v296 = vcvt.s32.f32 %v280
    %v297 = vcvt.s32.f32 %v281
    %v298 = vcvt.s32.f32 %v282
    %v299 = vcvt.s32.f32 %v283
    %v300 = vcvt.s32.f32 %v284
    %v301 = vcvt.s32.f32 %v285
    %v302 = vcvt.s32.f32 %v286
    %v303 = vcvt.s32.f32 %v287
    %v304 = vadd.f32 %v236, %v288
    %v305 = vadd.f32 %v237, %v289
    %v306 = vadd.f32 %v238, %v290
    %v307 = vadd.f32 %v239, %v291
    %v308 = vadd.f32 %v240, %v292
    %v309 = vadd.f32 %v241, %v293
    %v310 = vadd.f32 %v242, %v294
    %v311 = vadd.f32 %v243, %v295
    %v312 = vadd.f32 %v244, %v296
    %v313 = vadd.f32 %v245, %v297
    %v314 = vadd.f32 %v246, %v298
    %v315 = vadd.f32 %v247, %v299
    %v316 = vadd.f32 %v248, %v300
    %v317 = vadd.f32 %v249, %v301
    %v318 = vadd.f32 %v250, %v302
    %v319 = vadd.f32 %v251, %v303
    %v320 = vlaneseq
    %v321 = vshrl.u32 %v320, 7
    %v322 = vsub.s32 4, %v321
    %v323 = vrot.slane %v30, %v322
    %vm324 = vcmp.eq.s32.totalorder %v323, %v32
    %vm325 = vcmp.eq.s32.totalorder %v323, %v33
    %vm326 = vcmp.eq.s32.totalorder %v323, %v34
    %vm327 = vcmp.eq.s32.totalorder %v323, %v35
    %vm328 = vcmp.eq.s32.totalorder %v323, %v36
    %vm329 = vcmp.eq.s32.totalorder %v323, %v37
    %vm330 = vcmp.eq.s32.totalorder %v323, %v38
    %vm331 = vcmp.eq.s32.totalorder %v323, %v39
    %vm332 = vcmp.eq.s32.totalorder %v323, %v40
    %vm333 = vcmp.eq.s32.totalorder %v323, %v41
    %vm334 = vcmp.eq.s32.totalorder %v323, %v42
    %vm335 = vcmp.eq.s32.totalorder %v323, %v43
    %vm336 = vcmp.eq.s32.totalorder %v323, %v44
    %vm337 = vcmp.eq.s32.totalorder %v323, %v45
    %vm338 = vcmp.eq.s32.totalorder %v323, %v46
    %vm339 = vcmp.eq.s32.totalorder %v323, %v47
    %v340 = vsel %vm324, 1, 0
    %v341 = vsel %vm325, 1, 0
    %v342 = vsel %vm326, 1, 0
    %v343 = vsel %vm327, 1, 0
    %v344 = vsel %vm328, 1, 0
    %v345 = vsel %vm329, 1, 0
    %v346 = vsel %vm330, 1, 0
    %v347 = vsel %vm331, 1, 0
    %v348 = vsel %vm332, 1, 0
    %v349 = vsel %vm333, 1, 0
    %v350 = vsel %vm334, 1, 0
    %v351 = vsel %vm335, 1, 0
    %v352 = vsel %vm336, 1, 0
    %v353 = vsel %vm337, 1, 0
    %v354 = vsel %vm338, 1, 0
    %v355 = vsel %vm339, 1, 0
    %v356 = vcvt.s32.f32 %v340
    %v357 = vcvt.s32.f32 %v341
    %v358 = vcvt.s32.f32 %v342
    %v359 = vcvt.s32.f32 %v343
    %v360 = vcvt.s32.f32 %v344
    %v361 = vcvt.s32.f32 %v345
    %v362 = vcvt.s32.f32 %v346
    %v363 = vcvt.s32.f32 %v347
    %v364 = vcvt.s32.f32 %v348
    %v365 = vcvt.s32.f32 %v349
    %v366 = vcvt.s32.f32 %v350
    %v367 = vcvt.s32.f32 %v351
    %v368 = vcvt.s32.f32 %v352
    %v369 = vcvt.s32.f32 %v353
    %v370 = vcvt.s32.f32 %v354
    %v371 = vcvt.s32.f32 %v355
    %v372 = vadd.f32 %v304, %v356
    %v373 = vadd.f32 %v305, %v357
    %v374 = vadd.f32 %v306, %v358
    %v375 = vadd.f32 %v307, %v359
    %v376 = vadd.f32 %v308, %v360
    %v377 = vadd.f32 %v309, %v361
    %v378 = vadd.f32 %v310, %v362
    %v379 = vadd.f32 %v311, %v363
    %v380 = vadd.f32 %v312, %v364
    %v381 = vadd.f32 %v313, %v365
    %v382 = vadd.f32 %v314, %v366
    %v383 = vadd.f32 %v315, %v367
    %v384 = vadd.f32 %v316, %v368
    %v385 = vadd.f32 %v317, %v369
    %v386 = vadd.f32 %v318, %v370
    %v387 = vadd.f32 %v319, %v371
    %v388 = vlaneseq
    %v389 = vshrl.u32 %v388, 7
    %v390 = vsub.s32 5, %v389
    %v391 = vrot.slane %v30, %v390
    %vm392 = vcmp.eq.s32.totalorder %v391, %v32
    %vm393 = vcmp.eq.s32.totalorder %v391, %v33
    %vm394 = vcmp.eq.s32.totalorder %v391, %v34
    %vm395 = vcmp.eq.s32.totalorder %v391, %v35
    %vm396 = vcmp.eq.s32.totalorder %v391, %v36
    %vm397 = vcmp.eq.s32.totalorder %v391, %v37
    %vm398 = vcmp.eq.s32.totalorder %v391, %v38
    %vm399 = vcmp.eq.s32.totalorder %v391, %v39
    %vm400 = vcmp.eq.s32.totalorder %v391, %v40
    %vm401 = vcmp.eq.s32.totalorder %v391, %v41
    %vm402 = vcmp.eq.s32.totalorder %v391, %v42
    %vm403 = vcmp.eq.s32.totalorder %v391, %v43
    %vm404 = vcmp.eq.s32.totalorder %v391, %v44
    %vm405 = vcmp.eq.s32.totalorder %v391, %v45
    %vm406 = vcmp.eq.s32.totalorder %v391, %v46
    %vm407 = vcmp.eq.s32.totalorder %v391, %v47
    %v408 = vsel %vm392, 1, 0
    %v409 = vsel %vm393, 1, 0
    %v410 = vsel %vm394, 1, 0
    %v411 = vsel %vm395, 1, 0
    %v412 = vsel %vm396, 1, 0
    %v413 = vsel %vm397, 1, 0
    %v414 = vsel %vm398, 1, 0
    %v415 = vsel %vm399, 1, 0
    %v416 = vsel %vm400, 1, 0
    %v417 = vsel %vm401, 1, 0
    %v418 = vsel %vm402, 1, 0
    %v419 = vsel %vm403, 1, 0
    %v420 = vsel %vm404, 1, 0
    %v421 = vsel %vm405, 1, 0
    %v422 = vsel %vm406, 1, 0
    %v423 = vsel %vm407, 1, 0
    %v424 = vcvt.s32.f32 %v408
    %v425 = vcvt.s32.f32 %v409
    %v426 = vcvt.s32.f32 %v410
    %v427 = vcvt.s32.f32 %v411
    %v428 = vcvt.s32.f32 %v412
    %v429 = vcvt.s32.f32 %v413
    %v430 = vcvt.s32.f32 %v414
    %v431 = vcvt.s32.f32 %v415
    %v432 = vcvt.s32.f32 %v416
    %v433 = vcvt.s32.f32 %v417
    %v434 = vcvt.s32.f32 %v418
    %v435 = vcvt.s32.f32 %v419
    %v436 = vcvt.s32.f32 %v420
    %v437 = vcvt.s32.f32 %v421
    %v438 = vcvt.s32.f32 %v422
    %v439 = vcvt.s32.f32 %v423
    %v440 = vadd.f32 %v372, %v424
    %v441 = vadd.f32 %v373, %v425
    %v442 = vadd.f32 %v374, %v426
    %v443 = vadd.f32 %v375, %v427
    %v444 = vadd.f32 %v376, %v428
    %v445 = vadd.f32 %v377, %v429
    %v446 = vadd.f32 %v378, %v430
    %v447 = vadd.f32 %v379, %v431
    %v448 = vadd.f32 %v380, %v432
    %v449 = vadd.f32 %v381, %v433
    %v450 = vadd.f32 %v382, %v434
    %v451 = vadd.f32 %v383, %v435
    %v452 = vadd.f32 %v384, %v436
    %v453 = vadd.f32 %v385, %v437
    %v454 = vadd.f32 %v386, %v438
    %v455 = vadd.f32 %v387, %v439
    %v456 = vlaneseq
    %v457 = vshrl.u32 %v456, 7
    %v458 = vsub.s32 6, %v457
    %v459 = vrot.slane %v30, %v458
    %vm460 = vcmp.eq.s32.totalorder %v459, %v32
    %vm461 = vcmp.eq.s32.totalorder %v459, %v33
    %vm462 = vcmp.eq.s32.totalorder %v459, %v34
    %vm463 = vcmp.eq.s32.totalorder %v459, %v35
    %vm464 = vcmp.eq.s32.totalorder %v459, %v36
    %vm465 = vcmp.eq.s32.totalorder %v459, %v37
    %vm466 = vcmp.eq.s32.totalorder %v459, %v38
    %vm467 = vcmp.eq.s32.totalorder %v459, %v39
    %vm468 = vcmp.eq.s32.totalorder %v459, %v40
    %vm469 = vcmp.eq.s32.totalorder %v459, %v41
    %vm470 = vcmp.eq.s32.totalorder %v459, %v42
    %vm471 = vcmp.eq.s32.totalorder %v459, %v43
    %vm472 = vcmp.eq.s32.totalorder %v459, %v44
    %vm473 = vcmp.eq.s32.totalorder %v459, %v45
    %vm474 = vcmp.eq.s32.totalorder %v459, %v46
    %vm475 = vcmp.eq.s32.totalorder %v459, %v47
    %v476 = vsel %vm460, 1, 0
    %v477 = vsel %vm461, 1, 0
    %v478 = vsel %vm462, 1, 0
    %v479 = vsel %vm463, 1, 0
    %v480 = vsel %vm464, 1, 0
    %v481 = vsel %vm465, 1, 0
    %v482 = vsel %vm466, 1, 0
    %v483 = vsel %vm467, 1, 0
    %v484 = vsel %vm468, 1, 0
    %v485 = vsel %vm469, 1, 0
    %v486 = vsel %vm470, 1, 0
    %v487 = vsel %vm471, 1, 0
    %v488 = vsel %vm472, 1, 0
    %v489 = vsel %vm473, 1, 0
    %v490 = vsel %vm474, 1, 0
    %v491 = vsel %vm475, 1, 0
    %v492 = vcvt.s32.f32 %v476
    %v493 = vcvt.s32.f32 %v477
    %v494 = vcvt.s32.f32 %v478
    %v495 = vcvt.s32.f32 %v479
    %v496 = vcvt.s32.f32 %v480
    %v497 = vcvt.s32.f32 %v481
    %v498 = vcvt.s32.f32 %v482
    %v499 = vcvt.s32.f32 %v483
    %v500 = vcvt.s32.f32 %v484
    %v501 = vcvt.s32.f32 %v485
    %v502 = vcvt.s32.f32 %v486
    %v503 = vcvt.s32.f32 %v487
    %v504 = vcvt.s32.f32 %v488
    %v505 = vcvt.s32.f32 %v489
    %v506 = vcvt.s32.f32 %v490
    %v507 = vcvt.s32.f32 %v491
    %v508 = vadd.f32 %v440, %v492
    %v509 = vadd.f32 %v441, %v493
    %v510 = vadd.f32 %v442, %v494
    %v511 = vadd.f32 %v443, %v495
    %v512 = vadd.f32 %v444, %v496
    %v513 = vadd.f32 %v445, %v497
    %v514 = vadd.f32 %v446, %v498
    %v515 = vadd.f32 %v447, %v499
    %v516 = vadd.f32 %v448, %v500
    %v517 = vadd.f32 %v449, %v501
    %v518 = vadd.f32 %v450, %v502
    %v519 = vadd.f32 %v451, %v503
    %v520 = vadd.f32 %v452, %v504
    %v521 = vadd.f32 %v453, %v505
    %v522 = vadd.f32 %v454, %v506
    %v523 = vadd.f32 %v455, %v507
    %v524 = vlaneseq
    %v525 = vshrl.u32 %v524, 7
    %v526 = vsub.s32 7, %v525
    %v527 = vrot.slane %v30, %v526
    %vm528 = vcmp.eq.s32.totalorder %v527, %v32
    %vm529 = vcmp.eq.s32.totalorder %v527, %v33
    %vm530 = vcmp.eq.s32.totalorder %v527, %v34
    %vm531 = vcmp.eq.s32.totalorder %v527, %v35
    %vm532 = vcmp.eq.s32.totalorder %v527, %v36
    %vm533 = vcmp.eq.s32.totalorder %v527, %v37
    %vm534 = vcmp.eq.s32.totalorder %v527, %v38
    %vm535 = vcmp.eq.s32.totalorder %v527, %v39
    %vm536 = vcmp.eq.s32.totalorder %v527, %v40
    %vm537 = vcmp.eq.s32.totalorder %v527, %v41
    %vm538 = vcmp.eq.s32.totalorder %v527, %v42
    %vm539 = vcmp.eq.s32.totalorder %v527, %v43
    %vm540 = vcmp.eq.s32.totalorder %v527, %v44
    %vm541 = vcmp.eq.s32.totalorder %v527, %v45
    %vm542 = vcmp.eq.s32.totalorder %v527, %v46
    %vm543 = vcmp.eq.s32.totalorder %v527, %v47
    %v544 = vsel %vm528, 1, 0
    %v545 = vsel %vm529, 1, 0
    %v546 = vsel %vm530, 1, 0
    %v547 = vsel %vm531, 1, 0
    %v548 = vsel %vm532, 1, 0
    %v549 = vsel %vm533, 1, 0
    %v550 = vsel %vm534, 1, 0
    %v551 = vsel %vm535, 1, 0
    %v552 = vsel %vm536, 1, 0
    %v553 = vsel %vm537, 1, 0
    %v554 = vsel %vm538, 1, 0
    %v555 = vsel %vm539, 1, 0
    %v556 = vsel %vm540, 1, 0
    %v557 = vsel %vm541, 1, 0
    %v558 = vsel %vm542, 1, 0
    %v559 = vsel %vm543, 1, 0
    %v560 = vcvt.s32.f32 %v544
    %v561 = vcvt.s32.f32 %v545
    %v562 = vcvt.s32.f32 %v546
    %v563 = vcvt.s32.f32 %v547
    %v564 = vcvt.s32.f32 %v548
    %v565 = vcvt.s32.f32 %v549
    %v566 = vcvt.s32.f32 %v550
    %v567 = vcvt.s32.f32 %v551
    %v568 = vcvt.s32.f32 %v552
    %v569 = vcvt.s32.f32 %v553
    %v570 = vcvt.s32.f32 %v554
    %v571 = vcvt.s32.f32 %v555
    %v572 = vcvt.s32.f32 %v556
    %v573 = vcvt.s32.f32 %v557
    %v574 = vcvt.s32.f32 %v558
    %v575 = vcvt.s32.f32 %v559
    %v576 = vadd.f32 %v508, %v560
    %v577 = vadd.f32 %v509, %v561
    %v578 = vadd.f32 %v510, %v562
    %v579 = vadd.f32 %v511, %v563
    %v580 = vadd.f32 %v512, %v564
    %v581 = vadd.f32 %v513, %v565
    %v582 = vadd.f32 %v514, %v566
    %v583 = vadd.f32 %v515, %v567
    %v584 = vadd.f32 %v516, %v568
    %v585 = vadd.f32 %v517, %v569
    %v586 = vadd.f32 %v518, %v570
    %v587 = vadd.f32 %v519, %v571
    %v588 = vadd.f32 %v520, %v572
    %v589 = vadd.f32 %v521, %v573
    %v590 = vadd.f32 %v522, %v574
    %v591 = vadd.f32 %v523, %v575
    %v592 = vld [vmem:[%s2] sm:$0xf]
    %v593 = vld [vmem:[%s2 + $0x4] sm:$0xf]
    %v594 = vld [vmem:[%s2 + $0x8] sm:$0xf]
    %v595 = vld [vmem:[%s2 + $0xc] sm:$0xf]
    %v596 = vld [vmem:[%s2 + $0x10] sm:$0xf]
    %v597 = vld [vmem:[%s2 + $0x14] sm:$0xf]
    %v598 = vld [vmem:[%s2 + $0x18] sm:$0xf]
    %v599 = vld [vmem:[%s2 + $0x1c] sm:$0xf]
    %v600 = vld [vmem:[%s2 + $0x20] sm:$0xf]
    %v601 = vld [vmem:[%s2 + $0x24] sm:$0xf]
    %v602 = vld [vmem:[%s2 + $0x28] sm:$0xf]
    %v603 = vld [vmem:[%s2 + $0x2c] sm:$0xf]
    %v604 = vld [vmem:[%s2 + $0x30] sm:$0xf]
    %v605 = vld [vmem:[%s2 + $0x34] sm:$0xf]
    %v606 = vld [vmem:[%s2 + $0x38] sm:$0xf]
    %v607 = vld [vmem:[%s2 + $0x3c] sm:$0xf]
    %v608 = vpack.c.bf16 %v577, %v576
    %v609 = vpack.c.bf16 %v579, %v578
    %v610 = vpack.c.bf16 %v581, %v580
    %v611 = vpack.c.bf16 %v583, %v582
    %v612 = vpack.c.bf16 %v585, %v584
    %v613 = vpack.c.bf16 %v587, %v586
    %v614 = vpack.c.bf16 %v589, %v588
    %v615 = vpack.c.bf16 %v591, %v590
    %v632 = vunpack.c.l.b16 %v592
    %v633 = vunpack.c.l.b16 %v593
    %v634 = vunpack.c.l.b16 %v594
    %v635 = vunpack.c.l.b16 %v595
    %v636 = vunpack.c.l.b16 %v596
    %v637 = vunpack.c.l.b16 %v597
    %v638 = vunpack.c.l.b16 %v598
    %v639 = vunpack.c.l.b16 %v599
    %v640 = vunpack.c.l.b16 %v600
    %v641 = vunpack.c.l.b16 %v601
    %v642 = vunpack.c.l.b16 %v602
    %v643 = vunpack.c.l.b16 %v603
    %v644 = vunpack.c.l.b16 %v604
    %v645 = vunpack.c.l.b16 %v605
    %v646 = vunpack.c.l.b16 %v606
    %v647 = vunpack.c.l.b16 %v607
    %v648 = vpack.c.b16 %v633, %v632
    %v649 = vpack.c.b16 %v635, %v634
    %v650 = vpack.c.b16 %v637, %v636
    %v651 = vpack.c.b16 %v639, %v638
    %v652 = vpack.c.b16 %v641, %v640
    %v653 = vpack.c.b16 %v643, %v642
    %v654 = vpack.c.b16 %v645, %v644
    %v655 = vpack.c.b16 %v647, %v646
    %664 = vmatprep.subr.bf16.mxu0 0
    %665 = vmatpush1.bf16.msra.mxu0 %v608
    %666 = vmatprep.subr.bf16.mxu0 0
    %667 = vmatpush1.bf16.msra.mxu0 %v609
    %668 = vmatprep.subr.bf16.mxu0 0
    %669 = vmatpush1.bf16.msra.mxu0 %v610
    %670 = vmatprep.subr.bf16.mxu0 0
    %671 = vmatpush1.bf16.msra.mxu0 %v611
    %672 = vmatprep.subr.bf16.mxu0 0
    %673 = vmatpush1.bf16.msra.mxu0 %v612
    %674 = vmatprep.subr.bf16.mxu0 0
    %675 = vmatpush1.bf16.msra.mxu0 %v613
    %676 = vmatprep.subr.bf16.mxu0 0
    %677 = vmatpush1.bf16.msra.mxu0 %v614
    %678 = vmatprep.subr.bf16.mxu0 0
    %679 = vmatpush1.bf16.msra.mxu0 %v615
    %680 = vmatprep.subr.bf16.mxu0 0
    %681 = vmatpush1.bf16.msra.mxu0 0
    %682 = vmatprep.subr.bf16.mxu0 0
    %683 = vmatpush1.bf16.msra.mxu0 0
    %684 = vmatprep.subr.bf16.mxu0 0
    %685 = vmatpush1.bf16.msra.mxu0 0
    %686 = vmatprep.subr.bf16.mxu0 0
    %687 = vmatpush1.bf16.msra.mxu0 0
    %688 = vmatprep.subr.bf16.mxu0 0
    %689 = vmatpush1.bf16.msra.mxu0 0
    %690 = vmatprep.subr.bf16.mxu0 0
    %691 = vmatpush1.bf16.msra.mxu0 0
    %692 = vmatprep.subr.bf16.mxu0 0
    %693 = vmatpush1.bf16.msra.mxu0 0
    %694 = vmatprep.subr.bf16.mxu0 0
    %695 = vmatpush1.bf16.msra.mxu0 0
    %696 = vmatprep.mubr.bf16.mxu0 0
    %697 = vmatmul.mubr.bf16.gmra.mrb[0].mxu0 %v648
    %v698 = vpop.f32.mrb[0].mxu0
    %v699 = vadd.f32 0.0, %v698
    %v700 = vpop.f32.mrb[0].mxu0
    %v701 = vpop.f32.mrb[0].mxu0
    %v702 = vadd.f32 0.0, %v701
    %v703 = vpop.f32.mrb[0].mxu0
    %704 = vmatprep.mubr.bf16.mxu0 0
    %705 = vmatmul.mubr.bf16.gmra.mrb[0].mxu0 %v649
    %v706 = vpop.f32.mrb[0].mxu0
    %v707 = vadd.f32 0.0, %v706
    %v708 = vpop.f32.mrb[0].mxu0
    %v709 = vpop.f32.mrb[0].mxu0
    %v710 = vadd.f32 0.0, %v709
    %v711 = vpop.f32.mrb[0].mxu0
    %712 = vmatprep.mubr.bf16.mxu0 0
    %713 = vmatmul.mubr.bf16.gmra.mrb[0].mxu0 %v650
    %v714 = vpop.f32.mrb[0].mxu0
    %v715 = vadd.f32 0.0, %v714
    %v716 = vpop.f32.mrb[0].mxu0
    %v717 = vpop.f32.mrb[0].mxu0
    %v718 = vadd.f32 0.0, %v717
    %v719 = vpop.f32.mrb[0].mxu0
    %720 = vmatprep.mubr.bf16.mxu0 0
    %721 = vmatmul.mubr.bf16.gmra.mrb[0].mxu0 %v651
    %v722 = vpop.f32.mrb[0].mxu0
    %v723 = vadd.f32 0.0, %v722
    %v724 = vpop.f32.mrb[0].mxu0
    %v725 = vpop.f32.mrb[0].mxu0
    %v726 = vadd.f32 0.0, %v725
    %v727 = vpop.f32.mrb[0].mxu0
    %728 = vmatprep.mubr.bf16.mxu0 0
    %729 = vmatmul.mubr.bf16.gmra.mrb[0].mxu0 %v652
    %v730 = vpop.f32.mrb[0].mxu0
    %v731 = vadd.f32 0.0, %v730
    %v732 = vpop.f32.mrb[0].mxu0
    %v733 = vpop.f32.mrb[0].mxu0
    %v734 = vadd.f32 0.0, %v733
    %v735 = vpop.f32.mrb[0].mxu0
    %736 = vmatprep.mubr.bf16.mxu0 0
    %737 = vmatmul.mubr.bf16.gmra.mrb[0].mxu0 %v653
    %v738 = vpop.f32.mrb[0].mxu0
    %v739 = vadd.f32 0.0, %v738
    %v740 = vpop.f32.mrb[0].mxu0
    %v741 = vpop.f32.mrb[0].mxu0
    %v742 = vadd.f32 0.0, %v741
    %v743 = vpop.f32.mrb[0].mxu0
    %744 = vmatprep.mubr.bf16.mxu0 0
    %745 = vmatmul.mubr.bf16.gmra.mrb[0].mxu0 %v654
    %v746 = vpop.f32.mrb[0].mxu0
    %v747 = vadd.f32 0.0, %v746
    %v748 = vpop.f32.mrb[0].mxu0
    %v749 = vpop.f32.mrb[0].mxu0
    %v750 = vadd.f32 0.0, %v749
    %v751 = vpop.f32.mrb[0].mxu0
    %752 = vmatprep.mubr.bf16.mxu0 0
    %753 = vmatmul.mubr.bf16.gmra.mrb[0].mxu0 %v655
    %v754 = vpop.f32.mrb[0].mxu0
    %v755 = vadd.f32 0.0, %v754
    %v756 = vpop.f32.mrb[0].mxu0
    %v757 = vpop.f32.mrb[0].mxu0
    %v758 = vadd.f32 0.0, %v757
    %v759 = vpop.f32.mrb[0].mxu0
    %760 = vdwg.mxu0
    %v761 = vld [vmem:[%s1] sm:$0x1]
    %v762 = vrcp.pop %v761
    %v763 = vmul.f32 1.0, %v762
    %v765 = vlaneseq
    %v766 = vshrl.u32 %v765, 7
    %v767 = vsub.s32 0, %v766
    %v768 = vrot.slane %v763, %v767
    %v770 = vmul.f32 %v699, %v768
    %v771 = vmul.f32 %v702, %v768
    %v772 = vmul.f32 %v707, %v768
    %v773 = vmul.f32 %v710, %v768
    %v774 = vmul.f32 %v715, %v768
    %v775 = vmul.f32 %v718, %v768
    %v776 = vmul.f32 %v723, %v768
    %v777 = vmul.f32 %v726, %v768
    %v778 = vmul.f32 %v731, %v768
    %v779 = vmul.f32 %v734, %v768
    %v780 = vmul.f32 %v739, %v768
    %v781 = vmul.f32 %v742, %v768
    %v782 = vmul.f32 %v747, %v768
    %v783 = vmul.f32 %v750, %v768
    %v784 = vmul.f32 %v755, %v768
    %v785 = vmul.f32 %v758, %v768
    %v786 = vld [vmem:[%s3] sm:$0xf]
    %v787 = vld [vmem:[%s3 + $0x4] sm:$0xf]
    %v788 = vld [vmem:[%s3 + $0x8] sm:$0xf]
    %v789 = vld [vmem:[%s3 + $0xc] sm:$0xf]
    %v790 = vld [vmem:[%s3 + $0x10] sm:$0xf]
    %v791 = vld [vmem:[%s3 + $0x14] sm:$0xf]
    %v792 = vld [vmem:[%s3 + $0x18] sm:$0xf]
    %v793 = vld [vmem:[%s3 + $0x1c] sm:$0xf]
    %v794 = vld [vmem:[%s3 + $0x20] sm:$0xf]
    %v795 = vld [vmem:[%s3 + $0x24] sm:$0xf]
    %v796 = vld [vmem:[%s3 + $0x28] sm:$0xf]
    %v797 = vld [vmem:[%s3 + $0x2c] sm:$0xf]
    %v798 = vld [vmem:[%s3 + $0x30] sm:$0xf]
    %v799 = vld [vmem:[%s3 + $0x34] sm:$0xf]
    %v800 = vld [vmem:[%s3 + $0x38] sm:$0xf]
    %v801 = vld [vmem:[%s3 + $0x3c] sm:$0xf]
    %v802 = vpack.c.bf16 %v771, %v770
    %v803 = vpack.c.bf16 %v773, %v772
    %v804 = vpack.c.bf16 %v775, %v774
    %v805 = vpack.c.bf16 %v777, %v776
    %v806 = vpack.c.bf16 %v779, %v778
    %v807 = vpack.c.bf16 %v781, %v780
    %v808 = vpack.c.bf16 %v783, %v782
    %v809 = vpack.c.bf16 %v785, %v784
    %v810 = vld [vmem:[%s4] sm:$0xff]
    %v811 = vld [vmem:[%s4 + $0x8] sm:$0xff]
    %v812 = vld [vmem:[%s4 + $0x10] sm:$0xff]
    %v813 = vld [vmem:[%s4 + $0x18] sm:$0xff]
    %v814 = vld [vmem:[%s4 + $0x20] sm:$0xff]
    %v815 = vld [vmem:[%s4 + $0x28] sm:$0xff]
    %v816 = vld [vmem:[%s4 + $0x30] sm:$0xff]
    %v817 = vld [vmem:[%s4 + $0x38] sm:$0xff]
    %v818 = vld [vmem:[%s4 + $0x40] sm:$0xff]
    %v819 = vld [vmem:[%s4 + $0x48] sm:$0xff]
    %v820 = vld [vmem:[%s4 + $0x50] sm:$0xff]
    %v821 = vld [vmem:[%s4 + $0x58] sm:$0xff]
    %v822 = vld [vmem:[%s4 + $0x60] sm:$0xff]
    %v823 = vld [vmem:[%s4 + $0x68] sm:$0xff]
    %v824 = vld [vmem:[%s4 + $0x70] sm:$0xff]
    %v825 = vld [vmem:[%s4 + $0x78] sm:$0xff]
    %827 = vset.pattern.permute.xlu0 0
    %828 = vperm.xlu0 %827, %v810
    %v829 = vpop.permute.xlu0 %828
    %832 = vset.pattern.permute.xlu0 0
    %833 = vperm.xlu0 %832, %v811
    %v834 = vpop.permute.xlu0 %833
    %837 = vset.pattern.permute.xlu0 0
    %838 = vperm.xlu0 %837, %v812
    %v839 = vpop.permute.xlu0 %838
    %842 = vset.pattern.permute.xlu0 0
    %843 = vperm.xlu0 %842, %v813
    %v844 = vpop.permute.xlu0 %843
    %847 = vset.pattern.permute.xlu0 0
    %848 = vperm.xlu0 %847, %v814
    %v849 = vpop.permute.xlu0 %848
    %852 = vset.pattern.permute.xlu0 0
    %853 = vperm.xlu0 %852, %v815
    %v854 = vpop.permute.xlu0 %853
    %857 = vset.pattern.permute.xlu0 0
    %858 = vperm.xlu0 %857, %v816
    %v859 = vpop.permute.xlu0 %858
    %862 = vset.pattern.permute.xlu0 0
    %863 = vperm.xlu0 %862, %v817
    %v864 = vpop.permute.xlu0 %863
    %867 = vset.pattern.permute.xlu0 0
    %868 = vperm.xlu0 %867, %v818
    %v869 = vpop.permute.xlu0 %868
    %872 = vset.pattern.permute.xlu0 0
    %873 = vperm.xlu0 %872, %v819
    %v874 = vpop.permute.xlu0 %873
    %877 = vset.pattern.permute.xlu0 0
    %878 = vperm.xlu0 %877, %v820
    %v879 = vpop.permute.xlu0 %878
    %882 = vset.pattern.permute.xlu0 0
    %883 = vperm.xlu0 %882, %v821
    %v884 = vpop.permute.xlu0 %883
    %887 = vset.pattern.permute.xlu0 0
    %888 = vperm.xlu0 %887, %v822
    %v889 = vpop.permute.xlu0 %888
    %892 = vset.pattern.permute.xlu0 0
    %893 = vperm.xlu0 %892, %v823
    %v894 = vpop.permute.xlu0 %893
    %897 = vset.pattern.permute.xlu0 0
    %898 = vperm.xlu0 %897, %v824
    %v899 = vpop.permute.xlu0 %898
    %902 = vset.pattern.permute.xlu0 0
    %903 = vperm.xlu0 %902, %v825
    %v904 = vpop.permute.xlu0 %903
    %v922 = vunpack.c.l.b16 %v786
    %v923 = vunpack.c.l.b16 %v787
    %v924 = vunpack.c.l.b16 %v788
    %v925 = vunpack.c.l.b16 %v789
    %v926 = vunpack.c.l.b16 %v790
    %v927 = vunpack.c.l.b16 %v791
    %v928 = vunpack.c.l.b16 %v792
    %v929 = vunpack.c.l.b16 %v793
    %v930 = vunpack.c.l.b16 %v794
    %v931 = vunpack.c.l.b16 %v795
    %v932 = vunpack.c.l.b16 %v796
    %v933 = vunpack.c.l.b16 %v797
    %v934 = vunpack.c.l.b16 %v798
    %v935 = vunpack.c.l.b16 %v799
    %v936 = vunpack.c.l.b16 %v800
    %v937 = vunpack.c.l.b16 %v801
    %v938 = vpack.c.b16 %v923, %v922
    %v939 = vpack.c.b16 %v925, %v924
    %v940 = vpack.c.b16 %v927, %v926
    %v941 = vpack.c.b16 %v929, %v928
    %v942 = vpack.c.b16 %v931, %v930
    %v943 = vpack.c.b16 %v933, %v932
    %v944 = vpack.c.b16 %v935, %v934
    %v945 = vpack.c.b16 %v937, %v936
    %954 = vmatprep.subr.bf16.mxu0 0
    %955 = vmatpush1.bf16.msra.mxu0 %v802
    %956 = vmatprep.subr.bf16.mxu0 0
    %957 = vmatpush1.bf16.msra.mxu0 %v803
    %958 = vmatprep.subr.bf16.mxu0 0
    %959 = vmatpush1.bf16.msra.mxu0 %v804
    %960 = vmatprep.subr.bf16.mxu0 0
    %961 = vmatpush1.bf16.msra.mxu0 %v805
    %962 = vmatprep.subr.bf16.mxu0 0
    %963 = vmatpush1.bf16.msra.mxu0 %v806
    %964 = vmatprep.subr.bf16.mxu0 0
    %965 = vmatpush1.bf16.msra.mxu0 %v807
    %966 = vmatprep.subr.bf16.mxu0 0
    %967 = vmatpush1.bf16.msra.mxu0 %v808
    %968 = vmatprep.subr.bf16.mxu0 0
    %969 = vmatpush1.bf16.msra.mxu0 %v809
    %970 = vmatprep.subr.bf16.mxu0 0
    %971 = vmatpush1.bf16.msra.mxu0 0
    %972 = vmatprep.subr.bf16.mxu0 0
    %973 = vmatpush1.bf16.msra.mxu0 0
    %974 = vmatprep.subr.bf16.mxu0 0
    %975 = vmatpush1.bf16.msra.mxu0 0
    %976 = vmatprep.subr.bf16.mxu0 0
    %977 = vmatpush1.bf16.msra.mxu0 0
    %978 = vmatprep.subr.bf16.mxu0 0
    %979 = vmatpush1.bf16.msra.mxu0 0
    %980 = vmatprep.subr.bf16.mxu0 0
    %981 = vmatpush1.bf16.msra.mxu0 0
    %982 = vmatprep.subr.bf16.mxu0 0
    %983 = vmatpush1.bf16.msra.mxu0 0
    %984 = vmatprep.subr.bf16.mxu0 0
    %985 = vmatpush1.bf16.msra.mxu0 0
    %986 = vmatprep.mubr.bf16.mxu0 0
    %987 = vmatmul.mubr.bf16.gmra.mrb[0].mxu0 %v938
    %v988 = vpop.f32.mrb[0].mxu0
    %v989 = vadd.f32 %v829, %v988
    %v990 = vpop.f32.mrb[0].mxu0
    %v991 = vpop.f32.mrb[0].mxu0
    %v992 = vadd.f32 %v834, %v991
    %v993 = vpop.f32.mrb[0].mxu0
    %994 = vmatprep.mubr.bf16.mxu0 0
    %995 = vmatmul.mubr.bf16.gmra.mrb[0].mxu0 %v939
    %v996 = vpop.f32.mrb[0].mxu0
    %v997 = vadd.f32 %v839, %v996
    %v998 = vpop.f32.mrb[0].mxu0
    %v999 = vpop.f32.mrb[0].mxu0
    %v1000 = vadd.f32 %v844, %v999
    %v1001 = vpop.f32.mrb[0].mxu0
    %1002 = vmatprep.mubr.bf16.mxu0 0
    %1003 = vmatmul.mubr.bf16.gmra.mrb[0].mxu0 %v940
    %v1004 = vpop.f32.mrb[0].mxu0
    %v1005 = vadd.f32 %v849, %v1004
    %v1006 = vpop.f32.mrb[0].mxu0
    %v1007 = vpop.f32.mrb[0].mxu0
    %v1008 = vadd.f32 %v854, %v1007
    %v1009 = vpop.f32.mrb[0].mxu0
    %1010 = vmatprep.mubr.bf16.mxu0 0
    %1011 = vmatmul.mubr.bf16.gmra.mrb[0].mxu0 %v941
    %v1012 = vpop.f32.mrb[0].mxu0
    %v1013 = vadd.f32 %v859, %v1012
    %v1014 = vpop.f32.mrb[0].mxu0
    %v1015 = vpop.f32.mrb[0].mxu0
    %v1016 = vadd.f32 %v864, %v1015
    %v1017 = vpop.f32.mrb[0].mxu0
    %1018 = vmatprep.mubr.bf16.mxu0 0
    %1019 = vmatmul.mubr.bf16.gmra.mrb[0].mxu0 %v942
    %v1020 = vpop.f32.mrb[0].mxu0
    %v1021 = vadd.f32 %v869, %v1020
    %v1022 = vpop.f32.mrb[0].mxu0
    %v1023 = vpop.f32.mrb[0].mxu0
    %v1024 = vadd.f32 %v874, %v1023
    %v1025 = vpop.f32.mrb[0].mxu0
    %1026 = vmatprep.mubr.bf16.mxu0 0
    %1027 = vmatmul.mubr.bf16.gmra.mrb[0].mxu0 %v943
    %v1028 = vpop.f32.mrb[0].mxu0
    %v1029 = vadd.f32 %v879, %v1028
    %v1030 = vpop.f32.mrb[0].mxu0
    %v1031 = vpop.f32.mrb[0].mxu0
    %v1032 = vadd.f32 %v884, %v1031
    %v1033 = vpop.f32.mrb[0].mxu0
    %1034 = vmatprep.mubr.bf16.mxu0 0
    %1035 = vmatmul.mubr.bf16.gmra.mrb[0].mxu0 %v944
    %v1036 = vpop.f32.mrb[0].mxu0
    %v1037 = vadd.f32 %v889, %v1036
    %v1038 = vpop.f32.mrb[0].mxu0
    %v1039 = vpop.f32.mrb[0].mxu0
    %v1040 = vadd.f32 %v894, %v1039
    %v1041 = vpop.f32.mrb[0].mxu0
    %1042 = vmatprep.mubr.bf16.mxu0 0
    %1043 = vmatmul.mubr.bf16.gmra.mrb[0].mxu0 %v945
    %v1044 = vpop.f32.mrb[0].mxu0
    %v1045 = vadd.f32 %v899, %v1044
    %v1046 = vpop.f32.mrb[0].mxu0
    %v1047 = vpop.f32.mrb[0].mxu0
    %v1048 = vadd.f32 %v904, %v1047
    %v1049 = vpop.f32.mrb[0].mxu0
    %1050 = vdwg.mxu0
    %v1051 = vtanh.pop %v989
    %v1052 = vtanh.pop %v992
    %v1053 = vtanh.pop %v997
    %v1054 = vtanh.pop %v1000
    %v1055 = vtanh.pop %v1005
    %v1056 = vtanh.pop %v1008
    %v1057 = vtanh.pop %v1013
    %v1058 = vtanh.pop %v1016
    %v1059 = vtanh.pop %v1021
    %v1060 = vtanh.pop %v1024
    %v1061 = vtanh.pop %v1029
    %v1062 = vtanh.pop %v1032
    %v1063 = vtanh.pop %v1037
    %v1064 = vtanh.pop %v1040
    %v1065 = vtanh.pop %v1045
    %v1066 = vtanh.pop %v1048
    %v1067 = vld [vmem:[%s5] sm:$0xff]
    %v1068 = vld [vmem:[%s5 + $0x8] sm:$0xff]
    %v1069 = vld [vmem:[%s5 + $0x10] sm:$0xff]
    %v1070 = vld [vmem:[%s5 + $0x18] sm:$0xff]
    %v1071 = vld [vmem:[%s5 + $0x20] sm:$0xff]
    %v1072 = vld [vmem:[%s5 + $0x28] sm:$0xff]
    %v1073 = vld [vmem:[%s5 + $0x30] sm:$0xff]
    %v1074 = vld [vmem:[%s5 + $0x38] sm:$0xff]
    %v1075 = vld [vmem:[%s5 + $0x40] sm:$0xff]
    %v1076 = vld [vmem:[%s5 + $0x48] sm:$0xff]
    %v1077 = vld [vmem:[%s5 + $0x50] sm:$0xff]
    %v1078 = vld [vmem:[%s5 + $0x58] sm:$0xff]
    %v1079 = vld [vmem:[%s5 + $0x60] sm:$0xff]
    %v1080 = vld [vmem:[%s5 + $0x68] sm:$0xff]
    %v1081 = vld [vmem:[%s5 + $0x70] sm:$0xff]
    %v1082 = vld [vmem:[%s5 + $0x78] sm:$0xff]
    %1084 = vset.pattern.permute.xlu0 0
    %1085 = vperm.xlu0 %1084, %v1067
    %v1086 = vpop.permute.xlu0 %1085
    %1089 = vset.pattern.permute.xlu0 0
    %1090 = vperm.xlu0 %1089, %v1068
    %v1091 = vpop.permute.xlu0 %1090
    %1094 = vset.pattern.permute.xlu0 0
    %1095 = vperm.xlu0 %1094, %v1069
    %v1096 = vpop.permute.xlu0 %1095
    %1099 = vset.pattern.permute.xlu0 0
    %1100 = vperm.xlu0 %1099, %v1070
    %v1101 = vpop.permute.xlu0 %1100
    %1104 = vset.pattern.permute.xlu0 0
    %1105 = vperm.xlu0 %1104, %v1071
    %v1106 = vpop.permute.xlu0 %1105
    %1109 = vset.pattern.permute.xlu0 0
    %1110 = vperm.xlu0 %1109, %v1072
    %v1111 = vpop.permute.xlu0 %1110
    %1114 = vset.pattern.permute.xlu0 0
    %1115 = vperm.xlu0 %1114, %v1073
    %v1116 = vpop.permute.xlu0 %1115
    %1119 = vset.pattern.permute.xlu0 0
    %1120 = vperm.xlu0 %1119, %v1074
    %v1121 = vpop.permute.xlu0 %1120
    %1124 = vset.pattern.permute.xlu0 0
    %1125 = vperm.xlu0 %1124, %v1075
    %v1126 = vpop.permute.xlu0 %1125
    %1129 = vset.pattern.permute.xlu0 0
    %1130 = vperm.xlu0 %1129, %v1076
    %v1131 = vpop.permute.xlu0 %1130
    %1134 = vset.pattern.permute.xlu0 0
    %1135 = vperm.xlu0 %1134, %v1077
    %v1136 = vpop.permute.xlu0 %1135
    %1139 = vset.pattern.permute.xlu0 0
    %1140 = vperm.xlu0 %1139, %v1078
    %v1141 = vpop.permute.xlu0 %1140
    %1144 = vset.pattern.permute.xlu0 0
    %1145 = vperm.xlu0 %1144, %v1079
    %v1146 = vpop.permute.xlu0 %1145
    %1149 = vset.pattern.permute.xlu0 0
    %1150 = vperm.xlu0 %1149, %v1080
    %v1151 = vpop.permute.xlu0 %1150
    %1154 = vset.pattern.permute.xlu0 0
    %1155 = vperm.xlu0 %1154, %v1081
    %v1156 = vpop.permute.xlu0 %1155
    %1159 = vset.pattern.permute.xlu0 0
    %1160 = vperm.xlu0 %1159, %v1082
    %v1161 = vpop.permute.xlu0 %1160
    %v1163 = vmul.f32 %v1051, %v1086
    %v1164 = vmul.f32 %v1052, %v1091
    %v1165 = vmul.f32 %v1053, %v1096
    %v1166 = vmul.f32 %v1054, %v1101
    %v1167 = vmul.f32 %v1055, %v1106
    %v1168 = vmul.f32 %v1056, %v1111
    %v1169 = vmul.f32 %v1057, %v1116
    %v1170 = vmul.f32 %v1058, %v1121
    %v1171 = vmul.f32 %v1059, %v1126
    %v1172 = vmul.f32 %v1060, %v1131
    %v1173 = vmul.f32 %v1061, %v1136
    %v1174 = vmul.f32 %v1062, %v1141
    %v1175 = vmul.f32 %v1063, %v1146
    %v1176 = vmul.f32 %v1064, %v1151
    %v1177 = vmul.f32 %v1065, %v1156
    %v1178 = vmul.f32 %v1066, %v1161
    %vm1179 = vcmask 130048
    %v1180 = vsel %vm1179, %v1163, 0.0
    %v1181 = vsel %vm1179, %v1164, 0.0
    %v1182 = vadd.f32 %v1180, %v1181
    %v1183 = vsel %vm1179, %v1165, 0.0
    %v1184 = vadd.f32 %v1182, %v1183
    %v1185 = vsel %vm1179, %v1166, 0.0
    %v1186 = vadd.f32 %v1184, %v1185
    %v1187 = vsel %vm1179, %v1167, 0.0
    %v1188 = vadd.f32 %v1186, %v1187
    %v1189 = vsel %vm1179, %v1168, 0.0
    %v1190 = vadd.f32 %v1188, %v1189
    %v1191 = vsel %vm1179, %v1169, 0.0
    %v1192 = vadd.f32 %v1190, %v1191
    %v1193 = vsel %vm1179, %v1170, 0.0
    %v1194 = vadd.f32 %v1192, %v1193
    %v1195 = vsel %vm1179, %v1171, 0.0
    %v1196 = vadd.f32 %v1194, %v1195
    %v1197 = vsel %vm1179, %v1172, 0.0
    %v1198 = vadd.f32 %v1196, %v1197
    %v1199 = vsel %vm1179, %v1173, 0.0
    %v1200 = vadd.f32 %v1198, %v1199
    %v1201 = vsel %vm1179, %v1174, 0.0
    %v1202 = vadd.f32 %v1200, %v1201
    %v1203 = vsel %vm1179, %v1175, 0.0
    %v1204 = vadd.f32 %v1202, %v1203
    %v1205 = vsel %vm1179, %v1176, 0.0
    %v1206 = vadd.f32 %v1204, %v1205
    %v1207 = vsel %vm1179, %v1177, 0.0
    %v1208 = vadd.f32 %v1206, %v1207
    %v1209 = vsel %vm1179, %v1178, 0.0
    %v1210 = vadd.f32 %v1208, %v1209
    %v1211 = vrot.slane %v1210, 4
    %v1212 = vadd.f32 %v1210, %v1211
    %v1213 = vrot.slane %v1212, 2
    %v1214 = vadd.f32 %v1212, %v1213
    %v1215 = vrot.slane %v1214, 1
    %v1216 = vadd.f32 %v1214, %v1215
    %v1217 = vld [vmem:[#allocation2] sm:$0x1]
    %1219 = vset.pattern.permute.xlu0 0
    %1220 = vperm.xlu0 %1219, %v1217
    %v1221 = vpop.permute.xlu0 %1220
    %v1223 = vlaneseq
    %v1224 = vshrl.u32 %v1223, 7
    %v1225 = vsub.s32 0, %v1224
    %v1226 = vrot.slane %v1221, %v1225
    %v1227 = vadd.f32 %v1216, %v1226
    %v1228 = vxor.u32 %v1227, 2147483648
    %v1229 = vmul.f32 %v1228, 1.442695
    %v1230 = vpow.pop %v1229
    %v1231 = vadd.f32 %v1230, 1.0
    %v1232 = vrcp.pop %v1231
    %v1233 = vmul.f32 1.0, %v1232
    %vm1234 = vcmask 122880
    %1235 = vst.msk [vmem:[#allocation3] sm:$0x1] %vm1234, %v1233
    // Predicated region
    $region30: #{tpu_custom_call.1} parent=1 // pred_check
      _
    $region31: #{tpu_custom_call.1} parent=1 // pred_check_branch
      %1237 = sbr.rel (0) target = $region33
    $region32: #{tpu_custom_call.1} parent=1 // pred_region
      %s1239 = ssub.s32 16, 16
      %1240 = vsyncadd [#allocation4], %s1239
      %s1242 = sshll.u32 [#allocation3], 4
      %s1243 = int_to_ptr.vmem [resolvable:$true] %s1242
      %1245 = dma.vmem_to_hbm [thread:$0]  %s1243, 16, %s7, [#allocation4]
    $region33: #{tpu_custom_call.1} parent=1 // pred_fallthru
      _
    // Predicated region
    $region34: #{tpu_custom_call.1} parent=1 // pred_check
      _
    $region35: #{tpu_custom_call.1} parent=1 // pred_check_branch
      %1247 = sbr.rel (0) target = $region37
    $region36: #{tpu_custom_call.1} parent=1 // pred_region
      %1248 = dma.done [#allocation4], 16
    $region37: #{tpu_custom_call.1} parent=1 // pred_fallthru
      _
    %1249 = vsyncpa [#allocation4], 1

</llo_original>
